<compile_context>
chip_gen: v5e
topology: v5e:2x2
jax: 0.10.0
libtpu: 0.0.40
codegen_flags: <defaults>
</compile_context>

<pallas_src>
import functools

import jax
import jax.numpy as jnp
from jax import lax
from jax.experimental import pallas as pl
from jax.experimental.pallas import tpu as pltpu

EPS = 1e-5
LANE = 128  # TPU lane width; channel dims are padded to a multiple of this.


def _round_up(x, m):
    return (x + m - 1) // m * m


# ----------------------------- Pallas kernels ------------------------------


def _conv_bn_kernel(x_ref, w_ref, y_ref, stats_ref, *, ksize, stride, h_out, w_out):
    """Fused KxK conv (as K*K shifted matmuls) + per-channel sum / sum-of-squares.

    x_ref:     (stride*stride, Hps, Wps, Cin_p)  bf16/f32  phase-split padded image
    w_ref:     (ksize*ksize, Cin_p, Cout_p)      bf16/f32  per-tap weight matrices
    y_ref:     (h_out*w_out, Cout_p)             f32       conv output (one image)
    stats_ref: (8, Cout_p)                       f32       row 0 = sum, row 1 = sumsq
    """
    cout = y_ref.shape[-1]
    acc = jnp.zeros((h_out * w_out, cout), jnp.float32)
    for kh in range(ksize):
        for kw in range(ksize):
            phase = (kh % stride) * stride + (kw % stride)
            a = x_ref[phase,
                      pl.ds(kh // stride, h_out),
                      pl.ds(kw // stride, w_out), :]            # (h_out, w_out, Cin_p)
            a = a.reshape(h_out * w_out, a.shape[-1])
            acc = acc + jnp.dot(a, w_ref[kh * ksize + kw],
                                preferred_element_type=jnp.float32)
    y_ref[...] = acc
    # BN statistics fused into the conv epilogue (avoids re-reading y from HBM).
    psum = jnp.sum(acc, axis=0, keepdims=True)                  # (1, Cout_p)
    psq = jnp.sum(acc * acc, axis=0, keepdims=True)             # (1, Cout_p)
    row = lax.broadcasted_iota(jnp.int32, (8, cout), 0)
    stats_ref[...] = jnp.where(row == 0, psum, jnp.where(row == 1, psq, 0.0))


def _bn_relu_kernel(y_ref, p_ref, o_ref):
    # o = relu(y * scale + shift);  p rows: [scale, shift, ...]
    # BN math in f32; only the final store is rounded to o_ref.dtype (bf16 on
    # the production path), so conv2 sees exactly the values it would have seen
    # after a separate cast.
    o_ref[...] = jnp.maximum(
        y_ref[...] * p_ref[0:1, :] + p_ref[1:2, :], 0.0).astype(o_ref.dtype)


def _bn_add_relu_kernel(y_ref, r_ref, p_ref, o_ref):
    # o = relu(y*scale + shift + r*r_scale + r_shift);
    # p rows: [scale, shift, r_scale, r_shift, ...]
    o_ref[...] = jnp.maximum(
        y_ref[...] * p_ref[0:1, :] + p_ref[1:2, :]
        + r_ref[...] * p_ref[2:3, :] + p_ref[3:4, :], 0.0).astype(o_ref.dtype)


# ------------------------------ kernel wrappers -----------------------------


def _phase_split(xp, stride):
    """(N, Hp, Wp, C) -> (N*stride*stride, ceil(Hp/s), ceil(Wp/s), C).

    Pure re-layout (space-to-depth by stride phase), no data duplication; it
    lets the kernel read every conv tap as a unit-stride contiguous slice.
    """
    n, hp, wp, c = xp.shape
    hps = _round_up(hp, stride) // stride
    wps = _round_up(wp, stride) // stride
    xp = jnp.pad(xp, ((0, 0), (0, hps * stride - hp), (0, wps * stride - wp), (0, 0)))
    x6 = xp.reshape(n, hps, stride, wps, stride, c).transpose(0, 2, 4, 1, 3, 5)
    return x6.reshape(n * stride * stride, hps, wps, c)


def conv2d_bn_stats(x_nhwc, w_taps, ksize, stride, pad):
    """Conv (no bias) fused with per-channel sum/sumsq of its own output.

    x_nhwc: (N, H, W, Cin_p) f32 or MXU dtype, channels zero-padded to a lane
            multiple.
    w_taps: (ksize*ksize, Cin_p, Cout_p) in the MXU operand dtype.
    Returns y (N*Ho*Wo, Cout_p) f32, csum (Cout_p,), csumsq (Cout_p,), (Ho, Wo).
    """
    n, h, w, cin = x_nhwc.shape
    kk, cin_w, cout = w_taps.shape
    assert kk == ksize * ksize and cin_w == cin
    hp, wp = h + 2 * pad, w + 2 * pad
    h_out = (hp - ksize) // stride + 1
    w_out = (wp - ksize) // stride + 1
    assert (h_out * w_out) % 8 == 0, "per-image output rows must be a multiple of 8"

    xp = jnp.pad(x_nhwc, ((0, 0), (pad, pad), (pad, pad), (0, 0))).astype(w_taps.dtype)

    if ksize == 1 and stride > 1:
        # 1x1 conv: stride is pure subsampling with no tap overlap, so doing it
        # in the wrapper avoids DMA-ing unused rows/cols into VMEM.
        xp = xp[:, ::stride, ::stride, :]
        stride = 1

    xph = _phase_split(xp, stride)                     # (N*s*s, Hps, Wps, Cin_p)
    _, hps, wps, _ = xph.shape
    assert (ksize - 1) // stride + h_out <= hps
    assert (ksize - 1) // stride + w_out <= wps

    kernel = functools.partial(_conv_bn_kernel, ksize=ksize, stride=stride,
                               h_out=h_out, w_out=w_out)
    # TODO(synk): for very wide layers (Cin/Cout >> 128) add channel-tile grid
    # axes; at <=512 padded channels all blocks stay well under the VMEM budget.
    y, stats = pl.pallas_call(
        kernel,
        out_shape=(jax.ShapeDtypeStruct((n * h_out * w_out, cout), jnp.float32),
                   jax.ShapeDtypeStruct((n * 8, cout), jnp.float32)),
        grid=(n,),
        in_specs=[
            pl.BlockSpec((stride * stride, hps, wps, cin), lambda i: (i, 0, 0, 0)),
            pl.BlockSpec((kk, cin, cout), lambda i: (0, 0, 0)),
        ],
        out_specs=(
            pl.BlockSpec((h_out * w_out, cout), lambda i: (i, 0)),
            pl.BlockSpec((8, cout), lambda i: (i, 0)),
        ),
        compiler_params=pltpu.CompilerParams(dimension_semantics=("parallel",)),
    )(xph, w_taps)

    stats = stats.reshape(n, 8, cout)
    return y, stats[:, 0, :].sum(axis=0), stats[:, 1, :].sum(axis=0), (h_out, w_out)


def _row_tiling(m, max_tile=512):
    mp = _round_up(m, 8)
    tm = min(max_tile, mp)
    return tm, _round_up(mp, tm)


def _pad_rows(x, mp):
    m = x.shape[0]
    return x if m == mp else jnp.pad(x, ((0, mp - m), (0, 0)))


def bn_relu(y, scale, shift, out_dtype=jnp.float32):
    """Tiled fused BN-apply + ReLU over a lane-dense (M, C) activation."""
    m, c = y.shape
    tm, mp = _row_tiling(m)
    p = jnp.zeros((8, c), jnp.float32).at[0].set(scale).at[1].set(shift)
    out = pl.pallas_call(
        _bn_relu_kernel,
        out_shape=jax.ShapeDtypeStruct((mp, c), out_dtype),
        grid=(mp // tm,),
        in_specs=[pl.BlockSpec((tm, c), lambda i: (i, 0)),
                  pl.BlockSpec((8, c), lambda i: (0, 0))],
        out_specs=pl.BlockSpec((tm, c), lambda i: (i, 0)),
        compiler_params=pltpu.CompilerParams(dimension_semantics=("parallel",)),
    )(_pad_rows(y, mp), p)
    return out[:m]


def bn_add_relu(y, residual, scale, shift, r_scale, r_shift):
    """Tiled fused: relu(bn(y) + bn_or_identity(residual)) in a single pass."""
    m, c = y.shape
    tm, mp = _row_tiling(m)
    p = (jnp.zeros((8, c), jnp.float32)
         .at[0].set(scale).at[1].set(shift).at[2].set(r_scale).at[3].set(r_shift))
    out = pl.pallas_call(
        _bn_add_relu_kernel,
        out_shape=jax.ShapeDtypeStruct((mp, c), jnp.float32),
        grid=(mp // tm,),
        in_specs=[pl.BlockSpec((tm, c), lambda i: (i, 0)),
                  pl.BlockSpec((tm, c), lambda i: (i, 0)),
                  pl.BlockSpec((8, c), lambda i: (0, 0))],
        out_specs=pl.BlockSpec((tm, c), lambda i: (i, 0)),
        compiler_params=pltpu.CompilerParams(dimension_semantics=("parallel",)),
    )(_pad_rows(y, mp), _pad_rows(residual.astype(jnp.float32), mp), p)
    return out[:m]


# ------------------------------- JAX glue -----------------------------------


def prep_w_taps(w_oihw, cin_pad, cout_pad, dtype):
    """(Cout, Cin, k, k) -> (k*k, Cin_p, Cout_p) per-tap matrices (tap = kh*k+kw)."""
    cout, cin, k, _ = w_oihw.shape
    wt = jnp.transpose(w_oihw.astype(jnp.float32), (2, 3, 1, 0)).reshape(k * k, cin, cout)
    wt = jnp.pad(wt, ((0, 0), (0, cin_pad - cin), (0, cout_pad - cout)))
    return wt.astype(dtype)


def bn_affine(csum, csumsq, count, gamma, beta, c_pad):
    """Per-channel scale/shift for training-mode BN (tiny (C,) math, plain JAX).

    Sums are f32-accumulated; at BasicBlock scale E[x^2]-E[x]^2 cancellation is
    negligible (values are O(1) post-normalisation).
    """
    mean = csum / count
    var = jnp.maximum(csumsq / count - mean * mean, 0.0)      # biased variance
    g = jnp.pad(gamma.astype(jnp.float32), (0, c_pad - gamma.shape[0]))
    b = jnp.pad(beta.astype(jnp.float32), (0, c_pad - beta.shape[0]))
    scale = g / jnp.sqrt(var + EPS)
    shift = b - mean * scale
    return scale, shift


def basic_block_forward(x_nchw, params, in_planes, planes, stride,
                        mxu_dtype=jnp.bfloat16):
    n, cin, h, w = x_nchw.shape
    assert cin == in_planes
    cin_p = _round_up(cin, LANE)
    cout_p = _round_up(planes, LANE)

    x_nhwc = jnp.transpose(x_nchw, (0, 2, 3, 1)).astype(jnp.float32)
    x_pad = jnp.pad(x_nhwc, ((0, 0), (0, 0), (0, 0), (0, cin_p - cin)))

    # conv1 (3x3, stride, pad 1) fused with bn1 statistics
    y1, s1, q1, (ho, wo) = conv2d_bn_stats(
        x_pad, prep_w_taps(params["w1"], cin_p, cout_p, mxu_dtype), 3, stride, 1)
    m = n * ho * wo
    sc1, sh1 = bn_affine(s1, q1, m, params["g1"], params["b1"], cout_p)
    # out1 is written directly in the MXU operand dtype: it is only consumed by
    # conv2's matmuls, so this halves the intermediate HBM traffic and removes
    # the separate cast pass (BN math stays f32 inside the kernel).
    out1 = bn_relu(y1, sc1, sh1, out_dtype=mxu_dtype)          # (m, cout_p)

    # conv2 (3x3, stride 1, pad 1) fused with bn2 statistics
    y2, s2, q2, _ = conv2d_bn_stats(
        out1.reshape(n, ho, wo, cout_p),
        prep_w_taps(params["w2"], cout_p, cout_p, mxu_dtype), 3, 1, 1)
    sc2, sh2 = bn_affine(s2, q2, m, params["g2"], params["b2"], cout_p)

    # shortcut: projection (1x1 conv fused with its BN statistics) or identity
    if stride != 1 or in_planes != planes:
        ys, ss, qs, _ = conv2d_bn_stats(
            x_pad, prep_w_taps(params["ws"], cin_p, cout_p, mxu_dtype), 1, stride, 0)
        scs, shs = bn_affine(ss, qs, m, params["gs"], params["bs"], cout_p)
        residual = ys
    else:
        residual = x_pad.reshape(n * h * w, cin_p)             # cin_p == cout_p here
        scs = jnp.ones((cout_p,), jnp.float32)
        shs = jnp.zeros((cout_p,), jnp.float32)

    # bn2 + shortcut-BN + residual add + relu in a single elementwise pass
    out = bn_add_relu(y2, residual, sc2, sh2, scs, shs)        # (m, cout_p)
    out = out.reshape(n, ho, wo, cout_p)[:, :, :, :planes]
    return jnp.transpose(out, (0, 3, 1, 2))                    # back to NCHW


# --------------------------- pure-JAX reference -----------------------------


def ref_forward(x, params, in_planes, planes, stride, conv_dtype=jnp.float32):
    def conv(t, w, s, pad):
        return lax.conv_general_dilated(
            t.astype(conv_dtype), w.astype(conv_dtype), (s, s),
            [(pad, pad), (pad, pad)],
            dimension_numbers=("NCHW", "OIHW", "NCHW"),
            preferred_element_type=jnp.float32)

    def bn(t, g, b):
        mean = t.mean(axis=(0, 2, 3), keepdims=True)
        var = ((t - mean) ** 2).mean(axis=(0, 2, 3), keepdims=True)
        return ((t - mean) / jnp.sqrt(var + EPS)
                * g.reshape(1, -1, 1, 1) + b.reshape(1, -1, 1, 1))

    out = jax.nn.relu(bn(conv(x, params["w1"], stride, 1), params["g1"], params["b1"]))
    out = bn(conv(out, params["w2"], 1, 1), params["g2"], params["b2"])
    if stride != 1 or in_planes != planes:
        sc = bn(conv(x, params["ws"], stride, 0), params["gs"], params["bs"])
    else:
        sc = x
    return jax.nn.relu(out + sc)


# ---------------------------------- main ------------------------------------


def make_params(key, in_planes, planes, with_projection):
    ks = jax.random.split(key, 9)
    params = {
        "w1": 0.1 * jax.random.normal(ks[0], (planes, in_planes, 3, 3), jnp.float32),
        "g1": 1.0 + 0.1 * jax.random.normal(ks[1], (planes,), jnp.float32),
        "b1": 0.1 * jax.random.normal(ks[2], (planes,), jnp.float32),
        "w2": 0.1 * jax.random.normal(ks[3], (planes, planes, 3, 3), jnp.float32),
        "g2": 1.0 + 0.1 * jax.random.normal(ks[4], (planes,), jnp.float32),
        "b2": 0.1 * jax.random.normal(ks[5], (planes,), jnp.float32),
    }
    if with_projection:
        params.update({
            "ws": 0.1 * jax.random.normal(ks[6], (planes, in_planes, 1, 1), jnp.float32),
            "gs": 1.0 + 0.1 * jax.random.normal(ks[7], (planes,), jnp.float32),
            "bs": 0.1 * jax.random.normal(ks[8], (planes,), jnp.float32),
        })
    return params


if __name__ == "__main__":
    key = jax.random.PRNGKey(0)
    configs = [
        # (N, in_planes, planes, H, W, stride)
        (2, 4, 8, 16, 16, 2),   # projection shortcut (1x1 conv + BN)
        (2, 8, 8, 16, 16, 1),   # identity shortcut
    ]
    for cfg_idx, (n, in_planes, planes, h, w, stride) in enumerate(configs):
        key, kp, kx = jax.random.split(key, 3)
        with_proj = (stride != 1) or (in_planes != planes)
        params = make_params(kp, in_planes, planes, with_proj)
        x = jax.random.normal(kx, (n, in_planes, h, w), jnp.float32)

        h_out = (h - 1) // stride + 1
        w_out = (w - 1) // stride + 1
        ref = jax.block_until_ready(ref_forward(x, params, in_planes, planes, stride))

        # 1) f32-operand path: structural correctness at tight tolerance.
        out_f32 = jax.block_until_ready(
            basic_block_forward(x, params, in_planes, planes, stride,
                                mxu_dtype=jnp.float32))
        assert out_f32.shape == ref.shape == (n, planes, h_out, w_out)
        if not jnp.allclose(out_f32, ref, atol=1e-3, rtol=1e-3):
            err = float(jnp.max(jnp.abs(out_f32 - ref)))
            raise AssertionError(
                f"config {cfg_idx}: f32-path mismatch vs reference (max abs err {err:.2e})")

        # 2) production bf16-MXU path: tolerance accounts for bf16 operand
        #    rounding (typical |err| ~5e-3 after BN normalisation).
        out_bf16 = jax.block_until_ready(
            basic_block_forward(x, params, in_planes, planes, stride,
                                mxu_dtype=jnp.bfloat16))
        assert out_bf16.shape == (n, planes, h_out, w_out)
        if not jnp.allclose(out_bf16, ref, atol=5e-2, rtol=5e-2):
            err = float(jnp.max(jnp.abs(out_bf16 - ref)))
            raise AssertionError(
                f"config {cfg_idx}: bf16-path mismatch vs reference (max abs err {err:.2e})")

    print("KERNEL_OK")
</pallas_src>

<mosaic_0001>
module attributes {stable_mosaic.version = 11 : i64} {
  func.func @_conv_bn_kernel(%arg0: i32, %arg1: memref<4x9x9x128xf32, #tpu.memory_space<vmem>>, %arg2: memref<9x128x128xf32, #tpu.memory_space<vmem>>, %arg3: memref<64x128xf32, #tpu.memory_space<vmem>>, %arg4: memref<8x128xf32, #tpu.memory_space<vmem>>) attributes {dimension_semantics = [#tpu.dimension_semantics<parallel>], iteration_bounds = array<i64: 2>, scalar_prefetch = 0 : i64, scratch_operands = 0 : i64, tpu.core_type = #tpu.core_type<tc>, window_params = [{transform_indices = @transform_0, window_bounds = array<i64: 4, 9, 9, 128>}, {pipeline_mode = #tpu.pipeline_mode<synchronous>, transform_indices = @transform_1, window_bounds = array<i64: 9, 128, 128>}, {transform_indices = @transform_2, window_bounds = array<i64: 64, 128>}, {transform_indices = @transform_3, window_bounds = array<i64: 8, 128>}]} {
    %cst = arith.constant 0.000000e+00 : f32
    %0 = vector.broadcast %cst : f32 to vector<64x128xf32>
    %c0 = arith.constant 0 : index
    %c0_0 = arith.constant 0 : index
    %c0_1 = arith.constant 0 : index
    %c0_2 = arith.constant 0 : index
    %1 = vector.load %arg1[%c0, %c0_0, %c0_1, %c0_2] : memref<4x9x9x128xf32, #tpu.memory_space<vmem>>, vector<1x8x8x128xf32>
    %2 = vector.shape_cast %1 : vector<1x8x8x128xf32> to vector<8x8x128xf32>
    %3 = vector.shape_cast %2 : vector<8x8x128xf32> to vector<64x128xf32>
    %c0_3 = arith.constant 0 : index
    %c0_4 = arith.constant 0 : index
    %c0_5 = arith.constant 0 : index
    %4 = vector.load %arg2[%c0_3, %c0_4, %c0_5] : memref<9x128x128xf32, #tpu.memory_space<vmem>>, vector<1x128x128xf32>
    %5 = vector.shape_cast %4 : vector<1x128x128xf32> to vector<128x128xf32>
    %cst_6 = arith.constant dense<0.000000e+00> : vector<64x128xf32>
    %6 = tpu.matmul %3, %5, %cst_6 {dimension_numbers = #tpu.dot_dimension_numbers<[1], [0], [0], [1], [0, 0, 1, 1], [], []>} : vector<64x128xf32>, vector<128x128xf32>, vector<64x128xf32> -> vector<64x128xf32>
    %7 = arith.addf %0, %6 : vector<64x128xf32>
    %c1 = arith.constant 1 : index
    %c0_7 = arith.constant 0 : index
    %c0_8 = arith.constant 0 : index
    %c0_9 = arith.constant 0 : index
    %8 = vector.load %arg1[%c1, %c0_7, %c0_8, %c0_9] : memref<4x9x9x128xf32, #tpu.memory_space<vmem>>, vector<1x8x8x128xf32>
    %9 = vector.shape_cast %8 : vector<1x8x8x128xf32> to vector<8x8x128xf32>
    %10 = vector.shape_cast %9 : vector<8x8x128xf32> to vector<64x128xf32>
    %c1_10 = arith.constant 1 : index
    %c0_11 = arith.constant 0 : index
    %c0_12 = arith.constant 0 : index
    %11 = vector.load %arg2[%c1_10, %c0_11, %c0_12] : memref<9x128x128xf32, #tpu.memory_space<vmem>>, vector<1x128x128xf32>
    %12 = vector.shape_cast %11 : vector<1x128x128xf32> to vector<128x128xf32>
    %cst_13 = arith.constant dense<0.000000e+00> : vector<64x128xf32>
    %13 = tpu.matmul %10, %12, %cst_13 {dimension_numbers = #tpu.dot_dimension_numbers<[1], [0], [0], [1], [0, 0, 1, 1], [], []>} : vector<64x128xf32>, vector<128x128xf32>, vector<64x128xf32> -> vector<64x128xf32>
    %14 = arith.addf %7, %13 : vector<64x128xf32>
    %c0_14 = arith.constant 0 : index
    %c0_15 = arith.constant 0 : index
    %c1_16 = arith.constant 1 : index
    %c0_17 = arith.constant 0 : index
    %15 = vector.load %arg1[%c0_14, %c0_15, %c1_16, %c0_17] : memref<4x9x9x128xf32, #tpu.memory_space<vmem>>, vector<1x8x8x128xf32>
    %16 = vector.shape_cast %15 : vector<1x8x8x128xf32> to vector<8x8x128xf32>
    %17 = vector.shape_cast %16 : vector<8x8x128xf32> to vector<64x128xf32>
    %c2 = arith.constant 2 : index
    %c0_18 = arith.constant 0 : index
    %c0_19 = arith.constant 0 : index
    %18 = vector.load %arg2[%c2, %c0_18, %c0_19] : memref<9x128x128xf32, #tpu.memory_space<vmem>>, vector<1x128x128xf32>
    %19 = vector.shape_cast %18 : vector<1x128x128xf32> to vector<128x128xf32>
    %cst_20 = arith.constant dense<0.000000e+00> : vector<64x128xf32>
    %20 = tpu.matmul %17, %19, %cst_20 {dimension_numbers = #tpu.dot_dimension_numbers<[1], [0], [0], [1], [0, 0, 1, 1], [], []>} : vector<64x128xf32>, vector<128x128xf32>, vector<64x128xf32> -> vector<64x128xf32>
    %21 = arith.addf %14, %20 : vector<64x128xf32>
    %c2_21 = arith.constant 2 : index
    %c0_22 = arith.constant 0 : index
    %c0_23 = arith.constant 0 : index
    %c0_24 = arith.constant 0 : index
    %22 = vector.load %arg1[%c2_21, %c0_22, %c0_23, %c0_24] : memref<4x9x9x128xf32, #tpu.memory_space<vmem>>, vector<1x8x8x128xf32>
    %23 = vector.shape_cast %22 : vector<1x8x8x128xf32> to vector<8x8x128xf32>
    %24 = vector.shape_cast %23 : vector<8x8x128xf32> to vector<64x128xf32>
    %c3 = arith.constant 3 : index
    %c0_25 = arith.constant 0 : index
    %c0_26 = arith.constant 0 : index
    %25 = vector.load %arg2[%c3, %c0_25, %c0_26] : memref<9x128x128xf32, #tpu.memory_space<vmem>>, vector<1x128x128xf32>
    %26 = vector.shape_cast %25 : vector<1x128x128xf32> to vector<128x128xf32>
    %cst_27 = arith.constant dense<0.000000e+00> : vector<64x128xf32>
    %27 = tpu.matmul %24, %26, %cst_27 {dimension_numbers = #tpu.dot_dimension_numbers<[1], [0], [0], [1], [0, 0, 1, 1], [], []>} : vector<64x128xf32>, vector<128x128xf32>, vector<64x128xf32> -> vector<64x128xf32>
    %28 = arith.addf %21, %27 : vector<64x128xf32>
    %c3_28 = arith.constant 3 : index
    %c0_29 = arith.constant 0 : index
    %c0_30 = arith.constant 0 : index
    %c0_31 = arith.constant 0 : index
    %29 = vector.load %arg1[%c3_28, %c0_29, %c0_30, %c0_31] : memref<4x9x9x128xf32, #tpu.memory_space<vmem>>, vector<1x8x8x128xf32>
    %30 = vector.shape_cast %29 : vector<1x8x8x128xf32> to vector<8x8x128xf32>
    %31 = vector.shape_cast %30 : vector<8x8x128xf32> to vector<64x128xf32>
    %c4 = arith.constant 4 : index
    %c0_32 = arith.constant 0 : index
    %c0_33 = arith.constant 0 : index
    %32 = vector.load %arg2[%c4, %c0_32, %c0_33] : memref<9x128x128xf32, #tpu.memory_space<vmem>>, vector<1x128x128xf32>
    %33 = vector.shape_cast %32 : vector<1x128x128xf32> to vector<128x128xf32>
    %cst_34 = arith.constant dense<0.000000e+00> : vector<64x128xf32>
    %34 = tpu.matmul %31, %33, %cst_34 {dimension_numbers = #tpu.dot_dimension_numbers<[1], [0], [0], [1], [0, 0, 1, 1], [], []>} : vector<64x128xf32>, vector<128x128xf32>, vector<64x128xf32> -> vector<64x128xf32>
    %35 = arith.addf %28, %34 : vector<64x128xf32>
    %c2_35 = arith.constant 2 : index
    %c0_36 = arith.constant 0 : index
    %c1_37 = arith.constant 1 : index
    %c0_38 = arith.constant 0 : index
    %36 = vector.load %arg1[%c2_35, %c0_36, %c1_37, %c0_38] : memref<4x9x9x128xf32, #tpu.memory_space<vmem>>, vector<1x8x8x128xf32>
    %37 = vector.shape_cast %36 : vector<1x8x8x128xf32> to vector<8x8x128xf32>
    %38 = vector.shape_cast %37 : vector<8x8x128xf32> to vector<64x128xf32>
    %c5 = arith.constant 5 : index
    %c0_39 = arith.constant 0 : index
    %c0_40 = arith.constant 0 : index
    %39 = vector.load %arg2[%c5, %c0_39, %c0_40] : memref<9x128x128xf32, #tpu.memory_space<vmem>>, vector<1x128x128xf32>
    %40 = vector.shape_cast %39 : vector<1x128x128xf32> to vector<128x128xf32>
    %cst_41 = arith.constant dense<0.000000e+00> : vector<64x128xf32>
    %41 = tpu.matmul %38, %40, %cst_41 {dimension_numbers = #tpu.dot_dimension_numbers<[1], [0], [0], [1], [0, 0, 1, 1], [], []>} : vector<64x128xf32>, vector<128x128xf32>, vector<64x128xf32> -> vector<64x128xf32>
    %42 = arith.addf %35, %41 : vector<64x128xf32>
    %c0_42 = arith.constant 0 : index
    %c1_43 = arith.constant 1 : index
    %c0_44 = arith.constant 0 : index
    %c0_45 = arith.constant 0 : index
    %43 = vector.load %arg1[%c0_42, %c1_43, %c0_44, %c0_45] : memref<4x9x9x128xf32, #tpu.memory_space<vmem>>, vector<1x8x8x128xf32>
    %44 = vector.shape_cast %43 : vector<1x8x8x128xf32> to vector<8x8x128xf32>
    %45 = vector.shape_cast %44 : vector<8x8x128xf32> to vector<64x128xf32>
    %c6 = arith.constant 6 : index
    %c0_46 = arith.constant 0 : index
    %c0_47 = arith.constant 0 : index
    %46 = vector.load %arg2[%c6, %c0_46, %c0_47] : memref<9x128x128xf32, #tpu.memory_space<vmem>>, vector<1x128x128xf32>
    %47 = vector.shape_cast %46 : vector<1x128x128xf32> to vector<128x128xf32>
    %cst_48 = arith.constant dense<0.000000e+00> : vector<64x128xf32>
    %48 = tpu.matmul %45, %47, %cst_48 {dimension_numbers = #tpu.dot_dimension_numbers<[1], [0], [0], [1], [0, 0, 1, 1], [], []>} : vector<64x128xf32>, vector<128x128xf32>, vector<64x128xf32> -> vector<64x128xf32>
    %49 = arith.addf %42, %48 : vector<64x128xf32>
    %c1_49 = arith.constant 1 : index
    %c1_50 = arith.constant 1 : index
    %c0_51 = arith.constant 0 : index
    %c0_52 = arith.constant 0 : index
    %50 = vector.load %arg1[%c1_49, %c1_50, %c0_51, %c0_52] : memref<4x9x9x128xf32, #tpu.memory_space<vmem>>, vector<1x8x8x128xf32>
    %51 = vector.shape_cast %50 : vector<1x8x8x128xf32> to vector<8x8x128xf32>
    %52 = vector.shape_cast %51 : vector<8x8x128xf32> to vector<64x128xf32>
    %c7 = arith.constant 7 : index
    %c0_53 = arith.constant 0 : index
    %c0_54 = arith.constant 0 : index
    %53 = vector.load %arg2[%c7, %c0_53, %c0_54] : memref<9x128x128xf32, #tpu.memory_space<vmem>>, vector<1x128x128xf32>
    %54 = vector.shape_cast %53 : vector<1x128x128xf32> to vector<128x128xf32>
    %cst_55 = arith.constant dense<0.000000e+00> : vector<64x128xf32>
    %55 = tpu.matmul %52, %54, %cst_55 {dimension_numbers = #tpu.dot_dimension_numbers<[1], [0], [0], [1], [0, 0, 1, 1], [], []>} : vector<64x128xf32>, vector<128x128xf32>, vector<64x128xf32> -> vector<64x128xf32>
    %56 = arith.addf %49, %55 : vector<64x128xf32>
    %c0_56 = arith.constant 0 : index
    %c1_57 = arith.constant 1 : index
    %c1_58 = arith.constant 1 : index
    %c0_59 = arith.constant 0 : index
    %57 = vector.load %arg1[%c0_56, %c1_57, %c1_58, %c0_59] : memref<4x9x9x128xf32, #tpu.memory_space<vmem>>, vector<1x8x8x128xf32>
    %58 = vector.shape_cast %57 : vector<1x8x8x128xf32> to vector<8x8x128xf32>
    %59 = vector.shape_cast %58 : vector<8x8x128xf32> to vector<64x128xf32>
    %c8 = arith.constant 8 : index
    %c0_60 = arith.constant 0 : index
    %c0_61 = arith.constant 0 : index
    %60 = vector.load %arg2[%c8, %c0_60, %c0_61] : memref<9x128x128xf32, #tpu.memory_space<vmem>>, vector<1x128x128xf32>
    %61 = vector.shape_cast %60 : vector<1x128x128xf32> to vector<128x128xf32>
    %cst_62 = arith.constant dense<0.000000e+00> : vector<64x128xf32>
    %62 = tpu.matmul %59, %61, %cst_62 {dimension_numbers = #tpu.dot_dimension_numbers<[1], [0], [0], [1], [0, 0, 1, 1], [], []>} : vector<64x128xf32>, vector<128x128xf32>, vector<64x128xf32> -> vector<64x128xf32>
    %63 = arith.addf %56, %62 : vector<64x128xf32>
    %c0_63 = arith.constant 0 : index
    %c0_64 = arith.constant 0 : index
    %64 = vector.load %arg3[%c0_63, %c0_64] : memref<64x128xf32, #tpu.memory_space<vmem>>, vector<64x128xf32>
    tpu.vector_store %arg3[%c0_63, %c0_64], %63 {strides = array<i32>} : memref<64x128xf32, #tpu.memory_space<vmem>>, vector<64x128xf32>,
    %cst_65 = arith.constant dense<0.000000e+00> : vector<128xf32>
    %65 = vector.multi_reduction <add>, %63, %cst_65 [0] : vector<64x128xf32> to vector<128xf32>
    %66 = vector.shape_cast %65 : vector<128xf32> to vector<1x128xf32>
    %67 = arith.mulf %63, %63 : vector<64x128xf32>
    %cst_66 = arith.constant dense<0.000000e+00> : vector<128xf32>
    %68 = vector.multi_reduction <add>, %67, %cst_66 [0] : vector<64x128xf32> to vector<128xf32>
    %69 = vector.shape_cast %68 : vector<128xf32> to vector<1x128xf32>
    %70 = tpu.iota {dimensions = array<i32: 0>} : vector<8x128xi32>
    %c0_i32 = arith.constant 0 : i32
    %71 = vector.broadcast %c0_i32 : i32 to vector<8x128xi32>
    %72 = arith.cmpi eq, %70, %71 : vector<8x128xi32>
    %c1_i32 = arith.constant 1 : i32
    %73 = vector.broadcast %c1_i32 : i32 to vector<8x128xi32>
    %74 = arith.cmpi eq, %70, %73 : vector<8x128xi32>
    %cst_67 = arith.constant 0.000000e+00 : f32
    %75 = vector.shape_cast %69 : vector<1x128xf32> to vector<1x128xf32>
    %76 = vector.broadcast %75 : vector<1x128xf32> to vector<8x128xf32>
    %77 = vector.broadcast %cst_67 : f32 to vector<8x128xf32>
    %78 = arith.select %74, %76, %77 : vector<8x128xi1>, vector<8x128xf32>
    %79 = vector.shape_cast %66 : vector<1x128xf32> to vector<1x128xf32>
    %80 = vector.broadcast %79 : vector<1x128xf32> to vector<8x128xf32>
    %81 = arith.select %72, %80, %78 : vector<8x128xi1>, vector<8x128xf32>
    %c0_68 = arith.constant 0 : index
    %c0_69 = arith.constant 0 : index
    %82 = vector.load %arg4[%c0_68, %c0_69] : memref<8x128xf32, #tpu.memory_space<vmem>>, vector<8x128xf32>
    tpu.vector_store %arg4[%c0_68, %c0_69], %81 {strides = array<i32>} : memref<8x128xf32, #tpu.memory_space<vmem>>, vector<8x128xf32>,
    return
  }
  func.func @transform_0(%arg0: i32) -> (i32, i32, i32, i32) {
    %c0_i32 = arith.constant 0 : i32
    %c0_i32_0 = arith.constant 0 : i32
    %c0_i32_1 = arith.constant 0 : i32
    %c0_i32_2 = arith.constant 0 : i32
    return %arg0, %c0_i32, %c0_i32_0, %c0_i32_1 : i32, i32, i32, i32
  }
  func.func @transform_1(%arg0: i32) -> (i32, i32, i32) {
    %c0_i32 = arith.constant 0 : i32
    %c0_i32_0 = arith.constant 0 : i32
    %c0_i32_1 = arith.constant 0 : i32
    %c0_i32_2 = arith.constant 0 : i32
    return %c0_i32, %c0_i32_0, %c0_i32_1 : i32, i32, i32
  }
  func.func @transform_2(%arg0: i32) -> (i32, i32) {
    %c0_i32 = arith.constant 0 : i32
    %c0_i32_0 = arith.constant 0 : i32
    return %arg0, %c0_i32 : i32, i32
  }
  func.func @transform_3(%arg0: i32) -> (i32, i32) {
    %c0_i32 = arith.constant 0 : i32
    %c0_i32_0 = arith.constant 0 : i32
    return %arg0, %c0_i32 : i32, i32
  }
}

</mosaic_0001>

<llo_original>
// kernel: tpu_custom_call.1
$region0: #{tpu_custom_call.1}
  #allocation0 [shape = 'u32[]', space=smem, size = 0x4, offset = 0x4, fixed_abs, tag = 'smem constant byte address 0x4 - core index']
  #allocation1 [shape = 'u32[72,128]{1,0:T(1,128)}', space=vmem, size = 0x9000, scoped, tag = 'internal scratch']
  %s0 = inlined_call_operand.vmem [shape: f32[8,9,9,128], index: 0, kind: input, shape index: {}]
  %s1 = inlined_call_operand.vmem [shape: f32[9,128,128], index: 1, kind: input, shape index: {}]
  %s2 = inlined_call_operand.hbm [shape: f32[128,128], index: 2, kind: output, shape index: {0}]
  %s3 = inlined_call_operand.hbm [shape: f32[16,128], index: 3, kind: output, shape index: {1}]
  %4 = xla_tuple %s2, %s3
  %s5 = sld [smem:[#allocation0]]
  $region49: #{tpu_custom_call.1} parent=0
    _
  %s7 = ssub.s32 1, %s5
  %s8 = scalar_select 0, %s7, %s5
  $region1: #{tpu_custom_call.1} parent=0
    #allocation2 [shape = 'u8[65536]{0}', space=vmem, size = 0x10000, scoped, tag = 'output window, operand 0']
    #allocation3 [shape = 's32[2]{0}', space=sflag, size = 0x8, scoped, tag = 'scoped memory for tpu_custom_call.1']
    #allocation4 [shape = 'u8[8192]{0}', space=vmem, size = 0x2000, scoped, tag = 'output window, operand 1']
    #allocation5 [shape = 's32[2]{0}', space=sflag, size = 0x8, scoped, tag = 'scoped memory for tpu_custom_call.1']
    %9 = vsyncpa [#allocation3], 0
    %s10 = scalar_lea.sflag [#allocation3], 1
    %11 = vsyncpa %s10, 0
    %12 = vsyncpa [#allocation5], 0
    %s13 = scalar_lea.sflag [#allocation5], 1
    %14 = vsyncpa %s13, 0
    loop: start=0, step=1, limit=4
    $region2: #{tpu_custom_call.1} parent=1 // loop_pre_header
      _
    $region3: #{tpu_custom_call.1} parent=1 // loop_header
      %s16 = sphi 0, %s20
      %p17 = scmp.ge.s32.totalorder %s16, 4
      %s26 = sphi 0, %s28
      %s29 = sphi 0, %s26
      %s30 = sphi 0, %s29
      %s46 = sphi 0, %s30
      %s50 = sphi 0, %s50
      %s52 = sphi 0, %s50
      %s53 = sphi 0, %s52
      %s67 = sphi 0, %s53
      %s73 = sphi 0, %s75
      %s76 = sphi 0, %s73
      %s77 = sphi 0, %s76
      %s93 = sphi 0, %s77
      %s99 = sphi 0, %s101
      %s102 = sphi 0, %s99
      %s103 = sphi 0, %s102
      %s119 = sphi 0, %s103
    $region4: #{tpu_custom_call.1} parent=1 // loop_header_branch
      %19 = sbr.rel (%p17) target = $region8
    $region5: #{tpu_custom_call.1} parent=1 // loop_body
      %s21 = ssub.s32 %s16, 1
      %s22 = ssub.s32 %s16, 2
      %s23 = sadd.s32 %s16, 1
      %s24 = ssub.s32 %s16, %s23
      %p25 = scmp.eq.s32.totalorder %s24, 0
      %s27 = sadd.s32 %s26, 1
      %s28 = scalar_select %p25, %s26, %s27
      %p31 = pneg %p25
      %p32 = scmp.eq.s32.totalorder %s16, 1
      %p33 = por %p31, %p32
      %p34 = scmp.ne.s32.totalorder %s26, %s29
      %p35 = scmp.eq.s32.totalorder %s16, 0
      %p36 = por %p34, %p35
      %p37 = scmp.ne.s32.totalorder %s26, %s29
      %p38 = scmp.eq.s32.totalorder %s21, 1
      %p39 = por %p37, %p38
      %p40 = scmp.ne.s32.totalorder %s29, %s30
      %p41 = scmp.eq.s32.totalorder %s21, 0
      %p42 = por %p40, %p41
      %p43 = scmp.ne.s32.totalorder %s29, %s30
      %p44 = scmp.eq.s32.totalorder %s22, 1
      %p45 = por %p43, %p44
      %p47 = scmp.ne.s32.totalorder %s30, %s46
      %p48 = scmp.eq.s32.totalorder %s22, 0
      %p49 = por %p47, %p48
      %s51 = sadd.s32 %s50, 1
      %p54 = scmp.eq.s32.totalorder %s16, 1
      %p55 = scmp.ne.s32.totalorder %s50, %s52
      %p56 = scmp.eq.s32.totalorder %s16, 0
      %p57 = por %p55, %p56
      %p58 = scmp.ne.s32.totalorder %s50, %s52
      %p59 = scmp.eq.s32.totalorder %s21, 1
      %p60 = por %p58, %p59
      %p61 = scmp.ne.s32.totalorder %s52, %s53
      %p62 = scmp.eq.s32.totalorder %s21, 0
      %p63 = por %p61, %p62
      %p64 = scmp.ne.s32.totalorder %s52, %s53
      %p65 = scmp.eq.s32.totalorder %s22, 1
      %p66 = por %p64, %p65
      %p68 = scmp.ne.s32.totalorder %s53, %s67
      %p69 = scmp.eq.s32.totalorder %s22, 0
      %p70 = por %p68, %p69
      %s71 = ssub.s32 %s16, %s23
      %p72 = scmp.eq.s32.totalorder %s71, 0
      %s74 = sadd.s32 %s73, 1
      %s75 = scalar_select %p72, %s73, %s74
      %p78 = pneg %p72
      %p79 = scmp.eq.s32.totalorder %s16, 1
      %p80 = por %p78, %p79
      %p81 = scmp.ne.s32.totalorder %s73, %s76
      %p82 = scmp.eq.s32.totalorder %s16, 0
      %p83 = por %p81, %p82
      %p84 = scmp.ne.s32.totalorder %s73, %s76
      %p85 = scmp.eq.s32.totalorder %s21, 1
      %p86 = por %p84, %p85
      %p87 = scmp.ne.s32.totalorder %s76, %s77
      %p88 = scmp.eq.s32.totalorder %s21, 0
      %p89 = por %p87, %p88
      %p90 = scmp.ne.s32.totalorder %s76, %s77
      %p91 = scmp.eq.s32.totalorder %s22, 1
      %p92 = por %p90, %p91
      %p94 = scmp.ne.s32.totalorder %s77, %s93
      %p95 = scmp.eq.s32.totalorder %s22, 0
      %p96 = por %p94, %p95
      %s97 = ssub.s32 %s16, %s23
      %p98 = scmp.eq.s32.totalorder %s97, 0
      %s100 = sadd.s32 %s99, 1
      %s101 = scalar_select %p98, %s99, %s100
      %p104 = pneg %p98
      %p105 = scmp.eq.s32.totalorder %s16, 1
      %p106 = por %p104, %p105
      %p107 = scmp.ne.s32.totalorder %s99, %s102
      %p108 = scmp.eq.s32.totalorder %s16, 0
      %p109 = por %p107, %p108
      %p110 = scmp.ne.s32.totalorder %s99, %s102
      %p111 = scmp.eq.s32.totalorder %s21, 1
      %p112 = por %p110, %p111
      %p113 = scmp.ne.s32.totalorder %s102, %s103
      %p114 = scmp.eq.s32.totalorder %s21, 0
      %p115 = por %p113, %p114
      %p116 = scmp.ne.s32.totalorder %s102, %s103
      %p117 = scmp.eq.s32.totalorder %s22, 1
      %p118 = por %p116, %p117
      %p120 = scmp.ne.s32.totalorder %s103, %s119
      %p121 = scmp.eq.s32.totalorder %s22, 0
      %p122 = por %p120, %p121
      %p123 = scmp.le.s32.totalorder 1, %s16
      %p124 = scmp.lt.s32.totalorder %s16, 3
      %p125 = pnand %p123, %p124
      %p126 = pneg %p125
      // Predicated region
      $region9: #{tpu_custom_call.1} parent=5 // pred_check
        _
      $region10: #{tpu_custom_call.1} parent=5 // pred_check_branch
        %128 = sbr.rel (%p125) target = $region12
      $region11: #{tpu_custom_call.1} parent=5 // pred_region
        %s129 = ssub.s32 %s16, 1
        // Predicated region
        $region13: #{tpu_custom_call.1} parent=11 // pred_check
          %p130 = pneg %p63
        $region14: #{tpu_custom_call.1} parent=11 // pred_check_branch
          %132 = sbr.rel (%p130) target = $region16
        $region15: #{tpu_custom_call.1} parent=11 // pred_region
          _
        $region16: #{tpu_custom_call.1} parent=11 // pred_fallthru
          _
      $region12: #{tpu_custom_call.1} parent=5 // pred_fallthru
        _
      %p133 = scmp.lt.s32.totalorder %s16, 2
      // Predicated region
      $region17: #{tpu_custom_call.1} parent=5 // pred_check
        %p134 = pneg %p133
      $region18: #{tpu_custom_call.1} parent=5 // pred_check_branch
        %136 = sbr.rel (%p134) target = $region20
      $region19: #{tpu_custom_call.1} parent=5 // pred_region
        // Predicated region
        $region21: #{tpu_custom_call.1} parent=19 // pred_check
          %p137 = pneg %p36
        $region22: #{tpu_custom_call.1} parent=19 // pred_check_branch
          %139 = sbr.rel (%p137) target = $region24
        $region23: #{tpu_custom_call.1} parent=19 // pred_region
          %s140 = smul.u32 4, %s16
          %p141 = scmp.lt.s32.totalorder %s140, 7
          %s142 = scalar_select %p141, %s140, 7
          %s143 = smul.addr %s142, 18
          %s144 = smul.addr %s143, 8
          %s145 = scalar_lea.vmem %s0, %s144
          %s146 = smul.u32 4, %s16
        $region24: #{tpu_custom_call.1} parent=19 // pred_fallthru
          _
      $region20: #{tpu_custom_call.1} parent=5 // pred_fallthru
        _
      %p147 = scmp.le.s32.totalorder 1, %s16
      %p148 = scmp.lt.s32.totalorder %s16, 3
      %p149 = pnand %p147, %p148
      %p150 = pneg %p149
      // Predicated region
      $region25: #{tpu_custom_call.1} parent=5 // pred_check
        _
      $region26: #{tpu_custom_call.1} parent=5 // pred_check_branch
        %152 = sbr.rel (%p149) target = $region28
      $region27: #{tpu_custom_call.1} parent=5 // pred_region
        %s153 = ssub.s32 %s16, 1
        %s154 = smul.u32 4, %s21
        %p155 = scmp.lt.s32.totalorder %s154, 7
        %s156 = scalar_select %p155, %s154, 7
        %s157 = smul.addr %s156, 18
        %s158 = smul.addr %s157, 8
        %s159 = scalar_lea.vmem %s0, %s158
        %p160 = pneg %p42
        %p161 = pneg %p39
        %p162 = pneg %p63
        %p163 = pneg %p60
        %p164 = pneg %p89
        %p165 = pneg %p86
        %s166 = sand.u32 %s76, 1
        %s167 = scalar_lea.sflag [#allocation3], %s166
        %s168 = sand.u32 %s76, 1
        %s169 = smul.addr %s168, 64
        %s170 = scalar_lea.vmem [#allocation2], %s169
        %p171 = pneg %p115
        %p172 = pneg %p112
        %s173 = sand.u32 %s102, 1
        %s174 = scalar_lea.sflag [#allocation5], %s173
        %s175 = sand.u32 %s102, 1
        %s176 = smul.addr %s175, 8
        %s177 = scalar_lea.vmem [#allocation4], %s176
        %s178 = smul.u32 4, %s21
        %p179 = scmp.lt.s32.totalorder %s178, 7
        %s180 = scalar_select %p179, %s178, 7
        %s181 = smul.addr %s180, 18
        %s182 = smul.addr %s181, 8
        %s183 = scalar_lea.vmem %s0, %s182
        %s184 = smul.u32 4, %s21
        %s185 = smul.u32 8, %s21
        %v186 = vld [vmem:[%s183] sm:$0xff]
        %v187 = vld [vmem:[%s183 + $0x10] sm:$0xff]
        %v188 = vld [vmem:[%s183 + $0x20] sm:$0xff]
        %v189 = vld [vmem:[%s183 + $0x30] sm:$0xff]
        %v190 = vld [vmem:[%s183 + $0x40] sm:$0xff]
        %v191 = vld [vmem:[%s183 + $0x50] sm:$0xff]
        %v192 = vld [vmem:[%s183 + $0x60] sm:$0xff]
        %v193 = vld [vmem:[%s183 + $0x70] sm:$0xff]
        %v194 = vld [vmem:[%s1] sm:$0xff]
        %v195 = vld [vmem:[%s1 + $0x8] sm:$0xff]
        %v196 = vld [vmem:[%s1 + $0x10] sm:$0xff]
        %v197 = vld [vmem:[%s1 + $0x18] sm:$0xff]
        %v198 = vld [vmem:[%s1 + $0x20] sm:$0xff]
        %v199 = vld [vmem:[%s1 + $0x28] sm:$0xff]
        %v200 = vld [vmem:[%s1 + $0x30] sm:$0xff]
        %v201 = vld [vmem:[%s1 + $0x38] sm:$0xff]
        %v202 = vld [vmem:[%s1 + $0x40] sm:$0xff]
        %v203 = vld [vmem:[%s1 + $0x48] sm:$0xff]
        %v204 = vld [vmem:[%s1 + $0x50] sm:$0xff]
        %v205 = vld [vmem:[%s1 + $0x58] sm:$0xff]
        %v206 = vld [vmem:[%s1 + $0x60] sm:$0xff]
        %v207 = vld [vmem:[%s1 + $0x68] sm:$0xff]
        %v208 = vld [vmem:[%s1 + $0x70] sm:$0xff]
        %v209 = vld [vmem:[%s1 + $0x78] sm:$0xff]
        %s210 = scalar_lea.vmem %s183, 144
        %v211 = vld [vmem:[%s210] sm:$0xff]
        %v212 = vld [vmem:[%s210 + $0x10] sm:$0xff]
        %v213 = vld [vmem:[%s210 + $0x20] sm:$0xff]
        %v214 = vld [vmem:[%s210 + $0x30] sm:$0xff]
        %v215 = vld [vmem:[%s210 + $0x40] sm:$0xff]
        %v216 = vld [vmem:[%s210 + $0x50] sm:$0xff]
        %v217 = vld [vmem:[%s210 + $0x60] sm:$0xff]
        %v218 = vld [vmem:[%s210 + $0x70] sm:$0xff]
        %s219 = scalar_lea.vmem %s1, 128
        %v220 = vld [vmem:[%s219] sm:$0xff]
        %v221 = vld [vmem:[%s219 + $0x8] sm:$0xff]
        %v222 = vld [vmem:[%s219 + $0x10] sm:$0xff]
        %v223 = vld [vmem:[%s219 + $0x18] sm:$0xff]
        %v224 = vld [vmem:[%s219 + $0x20] sm:$0xff]
        %v225 = vld [vmem:[%s219 + $0x28] sm:$0xff]
        %v226 = vld [vmem:[%s219 + $0x30] sm:$0xff]
        %v227 = vld [vmem:[%s219 + $0x38] sm:$0xff]
        %v228 = vld [vmem:[%s219 + $0x40] sm:$0xff]
        %v229 = vld [vmem:[%s219 + $0x48] sm:$0xff]
        %v230 = vld [vmem:[%s219 + $0x50] sm:$0xff]
        %v231 = vld [vmem:[%s219 + $0x58] sm:$0xff]
        %v232 = vld [vmem:[%s219 + $0x60] sm:$0xff]
        %v233 = vld [vmem:[%s219 + $0x68] sm:$0xff]
        %v234 = vld [vmem:[%s219 + $0x70] sm:$0xff]
        %v235 = vld [vmem:[%s219 + $0x78] sm:$0xff]
        %236 = vmatpush.msra.mxu0 %v235
        %237 = vmatpush.msra.mxu0 %v234
        %238 = vmatpush.msra.mxu0 %v233
        %239 = vmatpush.msra.mxu0 %v232
        %240 = vmatpush.msra.mxu0 %v231
        %241 = vmatpush.msra.mxu0 %v230
        %242 = vmatpush.msra.mxu0 %v229
        %243 = vmatpush.msra.mxu0 %v228
        %244 = vmatpush.msra.mxu0 %v227
        %245 = vmatpush.msra.mxu0 %v226
        %246 = vmatpush.msra.mxu0 %v225
        %247 = vmatpush.msra.mxu0 %v224
        %248 = vmatpush.msra.mxu0 %v223
        %249 = vmatpush.msra.mxu0 %v222
        %250 = vmatpush.msra.mxu0 %v221
        %251 = vmatpush.msra.mxu0 %v220
        %252 = vmatmul.f32.gmra.mxu0 %v211
        %v253 = vpop.f32.mrf.mxu0
        %v254 = vadd.f32 0.0, %v253
        %255 = vmatmul.f32.gmra.mxu0 %v212
        %v256 = vpop.f32.mrf.mxu0
        %v257 = vadd.f32 0.0, %v256
        %258 = vmatmul.f32.gmra.mxu0 %v213
        %v259 = vpop.f32.mrf.mxu0
        %v260 = vadd.f32 0.0, %v259
        %261 = vmatmul.f32.gmra.mxu0 %v214
        %v262 = vpop.f32.mrf.mxu0
        %v263 = vadd.f32 0.0, %v262
        %264 = vmatmul.f32.gmra.mxu0 %v215
        %v265 = vpop.f32.mrf.mxu0
        %v266 = vadd.f32 0.0, %v265
        %267 = vmatmul.f32.gmra.mxu0 %v216
        %v268 = vpop.f32.mrf.mxu0
        %v269 = vadd.f32 0.0, %v268
        %270 = vmatmul.f32.gmra.mxu0 %v217
        %v271 = vpop.f32.mrf.mxu0
        %v272 = vadd.f32 0.0, %v271
        %273 = vmatmul.f32.gmra.mxu0 %v218
        %v274 = vpop.f32.mrf.mxu0
        %v275 = vadd.f32 0.0, %v274
        %276 = vdwg.mxu0
        %277 = vmatpush.msra.mxu0 %v209
        %278 = vmatpush.msra.mxu0 %v208
        %279 = vmatpush.msra.mxu0 %v207
        %280 = vmatpush.msra.mxu0 %v206
        %281 = vmatpush.msra.mxu0 %v205
        %282 = vmatpush.msra.mxu0 %v204
        %283 = vmatpush.msra.mxu0 %v203
        %284 = vmatpush.msra.mxu0 %v202
        %285 = vmatpush.msra.mxu0 %v201
        %286 = vmatpush.msra.mxu0 %v200
        %287 = vmatpush.msra.mxu0 %v199
        %288 = vmatpush.msra.mxu0 %v198
        %289 = vmatpush.msra.mxu0 %v197
        %290 = vmatpush.msra.mxu0 %v196
        %291 = vmatpush.msra.mxu0 %v195
        %292 = vmatpush.msra.mxu0 %v194
        %293 = vmatmul.f32.gmra.mxu0 %v186
        %v294 = vpop.f32.mrf.mxu0
        %v295 = vadd.f32 %v254, %v294
        %296 = vmatmul.f32.gmra.mxu0 %v187
        %v297 = vpop.f32.mrf.mxu0
        %v298 = vadd.f32 %v257, %v297
        %299 = vmatmul.f32.gmra.mxu0 %v188
        %v300 = vpop.f32.mrf.mxu0
        %v301 = vadd.f32 %v260, %v300
        %302 = vmatmul.f32.gmra.mxu0 %v189
        %v303 = vpop.f32.mrf.mxu0
        %v304 = vadd.f32 %v263, %v303
        %305 = vmatmul.f32.gmra.mxu0 %v190
        %v306 = vpop.f32.mrf.mxu0
        %v307 = vadd.f32 %v266, %v306
        %308 = vmatmul.f32.gmra.mxu0 %v191
        %v309 = vpop.f32.mrf.mxu0
        %v310 = vadd.f32 %v269, %v309
        %311 = vmatmul.f32.gmra.mxu0 %v192
        %v312 = vpop.f32.mrf.mxu0
        %v313 = vadd.f32 %v272, %v312
        %314 = vmatmul.f32.gmra.mxu0 %v193
        %v315 = vpop.f32.mrf.mxu0
        %v316 = vadd.f32 %v275, %v315
        %317 = vdwg.mxu0
        %v318 = vld [vmem:[%s183 + $0x1] sm:$0xff]
        %v319 = vld [vmem:[%s183 + $0x11] sm:$0xff]
        %v320 = vld [vmem:[%s183 + $0x21] sm:$0xff]
        %v321 = vld [vmem:[%s183 + $0x31] sm:$0xff]
        %v322 = vld [vmem:[%s183 + $0x41] sm:$0xff]
        %v323 = vld [vmem:[%s183 + $0x51] sm:$0xff]
        %v324 = vld [vmem:[%s183 + $0x61] sm:$0xff]
        %v325 = vld [vmem:[%s183 + $0x71] sm:$0xff]
        %s326 = scalar_lea.vmem %s1, 256
        %v327 = vld [vmem:[%s326] sm:$0xff]
        %v328 = vld [vmem:[%s326 + $0x8] sm:$0xff]
        %v329 = vld [vmem:[%s326 + $0x10] sm:$0xff]
        %v330 = vld [vmem:[%s326 + $0x18] sm:$0xff]
        %v331 = vld [vmem:[%s326 + $0x20] sm:$0xff]
        %v332 = vld [vmem:[%s326 + $0x28] sm:$0xff]
        %v333 = vld [vmem:[%s326 + $0x30] sm:$0xff]
        %v334 = vld [vmem:[%s326 + $0x38] sm:$0xff]
        %v335 = vld [vmem:[%s326 + $0x40] sm:$0xff]
        %v336 = vld [vmem:[%s326 + $0x48] sm:$0xff]
        %v337 = vld [vmem:[%s326 + $0x50] sm:$0xff]
        %v338 = vld [vmem:[%s326 + $0x58] sm:$0xff]
        %v339 = vld [vmem:[%s326 + $0x60] sm:$0xff]
        %v340 = vld [vmem:[%s326 + $0x68] sm:$0xff]
        %v341 = vld [vmem:[%s326 + $0x70] sm:$0xff]
        %v342 = vld [vmem:[%s326 + $0x78] sm:$0xff]
        %343 = vmatpush.msra.mxu0 %v342
        %344 = vmatpush.msra.mxu0 %v341
        %345 = vmatpush.msra.mxu0 %v340
        %346 = vmatpush.msra.mxu0 %v339
        %347 = vmatpush.msra.mxu0 %v338
        %348 = vmatpush.msra.mxu0 %v337
        %349 = vmatpush.msra.mxu0 %v336
        %350 = vmatpush.msra.mxu0 %v335
        %351 = vmatpush.msra.mxu0 %v334
        %352 = vmatpush.msra.mxu0 %v333
        %353 = vmatpush.msra.mxu0 %v332
        %354 = vmatpush.msra.mxu0 %v331
        %355 = vmatpush.msra.mxu0 %v330
        %356 = vmatpush.msra.mxu0 %v329
        %357 = vmatpush.msra.mxu0 %v328
        %358 = vmatpush.msra.mxu0 %v327
        %359 = vmatmul.f32.gmra.mxu0 %v318
        %v360 = vpop.f32.mrf.mxu0
        %v361 = vadd.f32 0.0, %v360
        %362 = vmatmul.f32.gmra.mxu0 %v319
        %v363 = vpop.f32.mrf.mxu0
        %v364 = vadd.f32 0.0, %v363
        %365 = vmatmul.f32.gmra.mxu0 %v320
        %v366 = vpop.f32.mrf.mxu0
        %v367 = vadd.f32 0.0, %v366
        %368 = vmatmul.f32.gmra.mxu0 %v321
        %v369 = vpop.f32.mrf.mxu0
        %v370 = vadd.f32 0.0, %v369
        %371 = vmatmul.f32.gmra.mxu0 %v322
        %v372 = vpop.f32.mrf.mxu0
        %v373 = vadd.f32 0.0, %v372
        %374 = vmatmul.f32.gmra.mxu0 %v323
        %v375 = vpop.f32.mrf.mxu0
        %v376 = vadd.f32 0.0, %v375
        %377 = vmatmul.f32.gmra.mxu0 %v324
        %v378 = vpop.f32.mrf.mxu0
        %v379 = vadd.f32 0.0, %v378
        %380 = vmatmul.f32.gmra.mxu0 %v325
        %v381 = vpop.f32.mrf.mxu0
        %v382 = vadd.f32 0.0, %v381
        %383 = vdwg.mxu0
        %v384 = vadd.f32 %v295, %v361
        %v385 = vadd.f32 %v298, %v364
        %v386 = vadd.f32 %v301, %v367
        %v387 = vadd.f32 %v304, %v370
        %v388 = vadd.f32 %v307, %v373
        %v389 = vadd.f32 %v310, %v376
        %v390 = vadd.f32 %v313, %v379
        %v391 = vadd.f32 %v316, %v382
        %s392 = scalar_lea.vmem %s183, 288
        %v393 = vld [vmem:[%s392] sm:$0xff]
        %v394 = vld [vmem:[%s392 + $0x10] sm:$0xff]
        %v395 = vld [vmem:[%s392 + $0x20] sm:$0xff]
        %v396 = vld [vmem:[%s392 + $0x30] sm:$0xff]
        %v397 = vld [vmem:[%s392 + $0x40] sm:$0xff]
        %v398 = vld [vmem:[%s392 + $0x50] sm:$0xff]
        %v399 = vld [vmem:[%s392 + $0x60] sm:$0xff]
        %v400 = vld [vmem:[%s392 + $0x70] sm:$0xff]
        %s401 = scalar_lea.vmem %s1, 384
        %v402 = vld [vmem:[%s401] sm:$0xff]
        %v403 = vld [vmem:[%s401 + $0x8] sm:$0xff]
        %v404 = vld [vmem:[%s401 + $0x10] sm:$0xff]
        %v405 = vld [vmem:[%s401 + $0x18] sm:$0xff]
        %v406 = vld [vmem:[%s401 + $0x20] sm:$0xff]
        %v407 = vld [vmem:[%s401 + $0x28] sm:$0xff]
        %v408 = vld [vmem:[%s401 + $0x30] sm:$0xff]
        %v409 = vld [vmem:[%s401 + $0x38] sm:$0xff]
        %v410 = vld [vmem:[%s401 + $0x40] sm:$0xff]
        %v411 = vld [vmem:[%s401 + $0x48] sm:$0xff]
        %v412 = vld [vmem:[%s401 + $0x50] sm:$0xff]
        %v413 = vld [vmem:[%s401 + $0x58] sm:$0xff]
        %v414 = vld [vmem:[%s401 + $0x60] sm:$0xff]
        %v415 = vld [vmem:[%s401 + $0x68] sm:$0xff]
        %v416 = vld [vmem:[%s401 + $0x70] sm:$0xff]
        %v417 = vld [vmem:[%s401 + $0x78] sm:$0xff]
        %418 = vmatpush.msra.mxu0 %v417
        %419 = vmatpush.msra.mxu0 %v416
        %420 = vmatpush.msra.mxu0 %v415
        %421 = vmatpush.msra.mxu0 %v414
        %422 = vmatpush.msra.mxu0 %v413
        %423 = vmatpush.msra.mxu0 %v412
        %424 = vmatpush.msra.mxu0 %v411
        %425 = vmatpush.msra.mxu0 %v410
        %426 = vmatpush.msra.mxu0 %v409
        %427 = vmatpush.msra.mxu0 %v408
        %428 = vmatpush.msra.mxu0 %v407
        %429 = vmatpush.msra.mxu0 %v406
        %430 = vmatpush.msra.mxu0 %v405
        %431 = vmatpush.msra.mxu0 %v404
        %432 = vmatpush.msra.mxu0 %v403
        %433 = vmatpush.msra.mxu0 %v402
        %434 = vmatmul.f32.gmra.mxu0 %v393
        %v435 = vpop.f32.mrf.mxu0
        %v436 = vadd.f32 0.0, %v435
        %437 = vmatmul.f32.gmra.mxu0 %v394
        %v438 = vpop.f32.mrf.mxu0
        %v439 = vadd.f32 0.0, %v438
        %440 = vmatmul.f32.gmra.mxu0 %v395
        %v441 = vpop.f32.mrf.mxu0
        %v442 = vadd.f32 0.0, %v441
        %443 = vmatmul.f32.gmra.mxu0 %v396
        %v444 = vpop.f32.mrf.mxu0
        %v445 = vadd.f32 0.0, %v444
        %446 = vmatmul.f32.gmra.mxu0 %v397
        %v447 = vpop.f32.mrf.mxu0
        %v448 = vadd.f32 0.0, %v447
        %449 = vmatmul.f32.gmra.mxu0 %v398
        %v450 = vpop.f32.mrf.mxu0
        %v451 = vadd.f32 0.0, %v450
        %452 = vmatmul.f32.gmra.mxu0 %v399
        %v453 = vpop.f32.mrf.mxu0
        %v454 = vadd.f32 0.0, %v453
        %455 = vmatmul.f32.gmra.mxu0 %v400
        %v456 = vpop.f32.mrf.mxu0
        %v457 = vadd.f32 0.0, %v456
        %458 = vdwg.mxu0
        %v459 = vadd.f32 %v384, %v436
        %v460 = vadd.f32 %v385, %v439
        %v461 = vadd.f32 %v386, %v442
        %v462 = vadd.f32 %v387, %v445
        %v463 = vadd.f32 %v388, %v448
        %v464 = vadd.f32 %v389, %v451
        %v465 = vadd.f32 %v390, %v454
        %v466 = vadd.f32 %v391, %v457
        %s467 = scalar_lea.vmem %s183, 432
        %v468 = vld [vmem:[%s467] sm:$0xff]
        %v469 = vld [vmem:[%s467 + $0x10] sm:$0xff]
        %v470 = vld [vmem:[%s467 + $0x20] sm:$0xff]
        %v471 = vld [vmem:[%s467 + $0x30] sm:$0xff]
        %v472 = vld [vmem:[%s467 + $0x40] sm:$0xff]
        %v473 = vld [vmem:[%s467 + $0x50] sm:$0xff]
        %v474 = vld [vmem:[%s467 + $0x60] sm:$0xff]
        %v475 = vld [vmem:[%s467 + $0x70] sm:$0xff]
        %s476 = scalar_lea.vmem %s1, 512
        %v477 = vld [vmem:[%s476] sm:$0xff]
        %v478 = vld [vmem:[%s476 + $0x8] sm:$0xff]
        %v479 = vld [vmem:[%s476 + $0x10] sm:$0xff]
        %v480 = vld [vmem:[%s476 + $0x18] sm:$0xff]
        %v481 = vld [vmem:[%s476 + $0x20] sm:$0xff]
        %v482 = vld [vmem:[%s476 + $0x28] sm:$0xff]
        %v483 = vld [vmem:[%s476 + $0x30] sm:$0xff]
        %v484 = vld [vmem:[%s476 + $0x38] sm:$0xff]
        %v485 = vld [vmem:[%s476 + $0x40] sm:$0xff]
        %v486 = vld [vmem:[%s476 + $0x48] sm:$0xff]
        %v487 = vld [vmem:[%s476 + $0x50] sm:$0xff]
        %v488 = vld [vmem:[%s476 + $0x58] sm:$0xff]
        %v489 = vld [vmem:[%s476 + $0x60] sm:$0xff]
        %v490 = vld [vmem:[%s476 + $0x68] sm:$0xff]
        %v491 = vld [vmem:[%s476 + $0x70] sm:$0xff]
        %v492 = vld [vmem:[%s476 + $0x78] sm:$0xff]
        %493 = vmatpush.msra.mxu0 %v492
        %494 = vmatpush.msra.mxu0 %v491
        %495 = vmatpush.msra.mxu0 %v490
        %496 = vmatpush.msra.mxu0 %v489
        %497 = vmatpush.msra.mxu0 %v488
        %498 = vmatpush.msra.mxu0 %v487
        %499 = vmatpush.msra.mxu0 %v486
        %500 = vmatpush.msra.mxu0 %v485
        %501 = vmatpush.msra.mxu0 %v484
        %502 = vmatpush.msra.mxu0 %v483
        %503 = vmatpush.msra.mxu0 %v482
        %504 = vmatpush.msra.mxu0 %v481
        %505 = vmatpush.msra.mxu0 %v480
        %506 = vmatpush.msra.mxu0 %v479
        %507 = vmatpush.msra.mxu0 %v478
        %508 = vmatpush.msra.mxu0 %v477
        %509 = vmatmul.f32.gmra.mxu0 %v468
        %v510 = vpop.f32.mrf.mxu0
        %v511 = vadd.f32 0.0, %v510
        %512 = vmatmul.f32.gmra.mxu0 %v469
        %v513 = vpop.f32.mrf.mxu0
        %v514 = vadd.f32 0.0, %v513
        %515 = vmatmul.f32.gmra.mxu0 %v470
        %v516 = vpop.f32.mrf.mxu0
        %v517 = vadd.f32 0.0, %v516
        %518 = vmatmul.f32.gmra.mxu0 %v471
        %v519 = vpop.f32.mrf.mxu0
        %v520 = vadd.f32 0.0, %v519
        %521 = vmatmul.f32.gmra.mxu0 %v472
        %v522 = vpop.f32.mrf.mxu0
        %v523 = vadd.f32 0.0, %v522
        %524 = vmatmul.f32.gmra.mxu0 %v473
        %v525 = vpop.f32.mrf.mxu0
        %v526 = vadd.f32 0.0, %v525
        %527 = vmatmul.f32.gmra.mxu0 %v474
        %v528 = vpop.f32.mrf.mxu0
        %v529 = vadd.f32 0.0, %v528
        %530 = vmatmul.f32.gmra.mxu0 %v475
        %v531 = vpop.f32.mrf.mxu0
        %v532 = vadd.f32 0.0, %v531
        %533 = vdwg.mxu0
        %v534 = vadd.f32 %v459, %v511
        %v535 = vadd.f32 %v460, %v514
        %v536 = vadd.f32 %v461, %v517
        %v537 = vadd.f32 %v462, %v520
        %v538 = vadd.f32 %v463, %v523
        %v539 = vadd.f32 %v464, %v526
        %v540 = vadd.f32 %v465, %v529
        %v541 = vadd.f32 %v466, %v532
        %v542 = vld [vmem:[%s392 + $0x1] sm:$0xff]
        %v543 = vld [vmem:[%s392 + $0x11] sm:$0xff]
        %v544 = vld [vmem:[%s392 + $0x21] sm:$0xff]
        %v545 = vld [vmem:[%s392 + $0x31] sm:$0xff]
        %v546 = vld [vmem:[%s392 + $0x41] sm:$0xff]
        %v547 = vld [vmem:[%s392 + $0x51] sm:$0xff]
        %v548 = vld [vmem:[%s392 + $0x61] sm:$0xff]
        %v549 = vld [vmem:[%s392 + $0x71] sm:$0xff]
        %s550 = scalar_lea.vmem %s1, 640
        %v551 = vld [vmem:[%s550] sm:$0xff]
        %v552 = vld [vmem:[%s550 + $0x8] sm:$0xff]
        %v553 = vld [vmem:[%s550 + $0x10] sm:$0xff]
        %v554 = vld [vmem:[%s550 + $0x18] sm:$0xff]
        %v555 = vld [vmem:[%s550 + $0x20] sm:$0xff]
        %v556 = vld [vmem:[%s550 + $0x28] sm:$0xff]
        %v557 = vld [vmem:[%s550 + $0x30] sm:$0xff]
        %v558 = vld [vmem:[%s550 + $0x38] sm:$0xff]
        %v559 = vld [vmem:[%s550 + $0x40] sm:$0xff]
        %v560 = vld [vmem:[%s550 + $0x48] sm:$0xff]
        %v561 = vld [vmem:[%s550 + $0x50] sm:$0xff]
        %v562 = vld [vmem:[%s550 + $0x58] sm:$0xff]
        %v563 = vld [vmem:[%s550 + $0x60] sm:$0xff]
        %v564 = vld [vmem:[%s550 + $0x68] sm:$0xff]
        %v565 = vld [vmem:[%s550 + $0x70] sm:$0xff]
        %v566 = vld [vmem:[%s550 + $0x78] sm:$0xff]
        %567 = vmatpush.msra.mxu0 %v566
        %568 = vmatpush.msra.mxu0 %v565
        %569 = vmatpush.msra.mxu0 %v564
        %570 = vmatpush.msra.mxu0 %v563
        %571 = vmatpush.msra.mxu0 %v562
        %572 = vmatpush.msra.mxu0 %v561
        %573 = vmatpush.msra.mxu0 %v560
        %574 = vmatpush.msra.mxu0 %v559
        %575 = vmatpush.msra.mxu0 %v558
        %576 = vmatpush.msra.mxu0 %v557
        %577 = vmatpush.msra.mxu0 %v556
        %578 = vmatpush.msra.mxu0 %v555
        %579 = vmatpush.msra.mxu0 %v554
        %580 = vmatpush.msra.mxu0 %v553
        %581 = vmatpush.msra.mxu0 %v552
        %582 = vmatpush.msra.mxu0 %v551
        %583 = vmatmul.f32.gmra.mxu0 %v542
        %v584 = vpop.f32.mrf.mxu0
        %v585 = vadd.f32 0.0, %v584
        %586 = vmatmul.f32.gmra.mxu0 %v543
        %v587 = vpop.f32.mrf.mxu0
        %v588 = vadd.f32 0.0, %v587
        %589 = vmatmul.f32.gmra.mxu0 %v544
        %v590 = vpop.f32.mrf.mxu0
        %v591 = vadd.f32 0.0, %v590
        %592 = vmatmul.f32.gmra.mxu0 %v545
        %v593 = vpop.f32.mrf.mxu0
        %v594 = vadd.f32 0.0, %v593
        %595 = vmatmul.f32.gmra.mxu0 %v546
        %v596 = vpop.f32.mrf.mxu0
        %v597 = vadd.f32 0.0, %v596
        %598 = vmatmul.f32.gmra.mxu0 %v547
        %v599 = vpop.f32.mrf.mxu0
        %v600 = vadd.f32 0.0, %v599
        %601 = vmatmul.f32.gmra.mxu0 %v548
        %v602 = vpop.f32.mrf.mxu0
        %v603 = vadd.f32 0.0, %v602
        %604 = vmatmul.f32.gmra.mxu0 %v549
        %v605 = vpop.f32.mrf.mxu0
        %v606 = vadd.f32 0.0, %v605
        %607 = vdwg.mxu0
        %v608 = vadd.f32 %v534, %v585
        %v609 = vadd.f32 %v535, %v588
        %v610 = vadd.f32 %v536, %v591
        %v611 = vadd.f32 %v537, %v594
        %v612 = vadd.f32 %v538, %v597
        %v613 = vadd.f32 %v539, %v600
        %v614 = vadd.f32 %v540, %v603
        %v615 = vadd.f32 %v541, %v606
        %s616 = scalar_lea.vmem %s183, 16
        %v617 = vld [vmem:[%s616] sm:$0xff]
        %v618 = vld [vmem:[%s616 + $0x10] sm:$0xff]
        %v619 = vld [vmem:[%s616 + $0x20] sm:$0xff]
        %v620 = vld [vmem:[%s616 + $0x30] sm:$0xff]
        %v621 = vld [vmem:[%s616 + $0x40] sm:$0xff]
        %v622 = vld [vmem:[%s616 + $0x50] sm:$0xff]
        %v623 = vld [vmem:[%s616 + $0x60] sm:$0xff]
        %v624 = vld [vmem:[%s616 + $0x70] sm:$0xff]
        %s625 = scalar_lea.vmem %s1, 768
        %v626 = vld [vmem:[%s625] sm:$0xff]
        %v627 = vld [vmem:[%s625 + $0x8] sm:$0xff]
        %v628 = vld [vmem:[%s625 + $0x10] sm:$0xff]
        %v629 = vld [vmem:[%s625 + $0x18] sm:$0xff]
        %v630 = vld [vmem:[%s625 + $0x20] sm:$0xff]
        %v631 = vld [vmem:[%s625 + $0x28] sm:$0xff]
        %v632 = vld [vmem:[%s625 + $0x30] sm:$0xff]
        %v633 = vld [vmem:[%s625 + $0x38] sm:$0xff]
        %v634 = vld [vmem:[%s625 + $0x40] sm:$0xff]
        %v635 = vld [vmem:[%s625 + $0x48] sm:$0xff]
        %v636 = vld [vmem:[%s625 + $0x50] sm:$0xff]
        %v637 = vld [vmem:[%s625 + $0x58] sm:$0xff]
        %v638 = vld [vmem:[%s625 + $0x60] sm:$0xff]
        %v639 = vld [vmem:[%s625 + $0x68] sm:$0xff]
        %v640 = vld [vmem:[%s625 + $0x70] sm:$0xff]
        %v641 = vld [vmem:[%s625 + $0x78] sm:$0xff]
        %642 = vmatpush.msra.mxu0 %v641
        %643 = vmatpush.msra.mxu0 %v640
        %644 = vmatpush.msra.mxu0 %v639
        %645 = vmatpush.msra.mxu0 %v638
        %646 = vmatpush.msra.mxu0 %v637
        %647 = vmatpush.msra.mxu0 %v636
        %648 = vmatpush.msra.mxu0 %v635
        %649 = vmatpush.msra.mxu0 %v634
        %650 = vmatpush.msra.mxu0 %v633
        %651 = vmatpush.msra.mxu0 %v632
        %652 = vmatpush.msra.mxu0 %v631
        %653 = vmatpush.msra.mxu0 %v630
        %654 = vmatpush.msra.mxu0 %v629
        %655 = vmatpush.msra.mxu0 %v628
        %656 = vmatpush.msra.mxu0 %v627
        %657 = vmatpush.msra.mxu0 %v626
        %658 = vmatmul.f32.gmra.mxu0 %v617
        %v659 = vpop.f32.mrf.mxu0
        %v660 = vadd.f32 0.0, %v659
        %661 = vmatmul.f32.gmra.mxu0 %v618
        %v662 = vpop.f32.mrf.mxu0
        %v663 = vadd.f32 0.0, %v662
        %664 = vmatmul.f32.gmra.mxu0 %v619
        %v665 = vpop.f32.mrf.mxu0
        %v666 = vadd.f32 0.0, %v665
        %667 = vmatmul.f32.gmra.mxu0 %v620
        %v668 = vpop.f32.mrf.mxu0
        %v669 = vadd.f32 0.0, %v668
        %670 = vmatmul.f32.gmra.mxu0 %v621
        %v671 = vpop.f32.mrf.mxu0
        %v672 = vadd.f32 0.0, %v671
        %673 = vmatmul.f32.gmra.mxu0 %v622
        %v674 = vpop.f32.mrf.mxu0
        %v675 = vadd.f32 0.0, %v674
        %676 = vmatmul.f32.gmra.mxu0 %v623
        %v677 = vpop.f32.mrf.mxu0
        %v678 = vadd.f32 0.0, %v677
        %679 = vmatmul.f32.gmra.mxu0 %v624
        %v680 = vpop.f32.mrf.mxu0
        %v681 = vadd.f32 0.0, %v680
        %682 = vdwg.mxu0
        %v683 = vadd.f32 %v608, %v660
        %v684 = vadd.f32 %v609, %v663
        %v685 = vadd.f32 %v610, %v666
        %v686 = vadd.f32 %v611, %v669
        %v687 = vadd.f32 %v612, %v672
        %v688 = vadd.f32 %v613, %v675
        %v689 = vadd.f32 %v614, %v678
        %v690 = vadd.f32 %v615, %v681
        %s691 = scalar_lea.vmem %s183, 160
        %v692 = vld [vmem:[%s691] sm:$0xff]
        %v693 = vld [vmem:[%s691 + $0x10] sm:$0xff]
        %v694 = vld [vmem:[%s691 + $0x20] sm:$0xff]
        %v695 = vld [vmem:[%s691 + $0x30] sm:$0xff]
        %v696 = vld [vmem:[%s691 + $0x40] sm:$0xff]
        %v697 = vld [vmem:[%s691 + $0x50] sm:$0xff]
        %v698 = vld [vmem:[%s691 + $0x60] sm:$0xff]
        %v699 = vld [vmem:[%s691 + $0x70] sm:$0xff]
        %s700 = scalar_lea.vmem %s1, 896
        %v701 = vld [vmem:[%s700] sm:$0xff]
        %v702 = vld [vmem:[%s700 + $0x8] sm:$0xff]
        %v703 = vld [vmem:[%s700 + $0x10] sm:$0xff]
        %v704 = vld [vmem:[%s700 + $0x18] sm:$0xff]
        %v705 = vld [vmem:[%s700 + $0x20] sm:$0xff]
        %v706 = vld [vmem:[%s700 + $0x28] sm:$0xff]
        %v707 = vld [vmem:[%s700 + $0x30] sm:$0xff]
        %v708 = vld [vmem:[%s700 + $0x38] sm:$0xff]
        %v709 = vld [vmem:[%s700 + $0x40] sm:$0xff]
        %v710 = vld [vmem:[%s700 + $0x48] sm:$0xff]
        %v711 = vld [vmem:[%s700 + $0x50] sm:$0xff]
        %v712 = vld [vmem:[%s700 + $0x58] sm:$0xff]
        %v713 = vld [vmem:[%s700 + $0x60] sm:$0xff]
        %v714 = vld [vmem:[%s700 + $0x68] sm:$0xff]
        %v715 = vld [vmem:[%s700 + $0x70] sm:$0xff]
        %v716 = vld [vmem:[%s700 + $0x78] sm:$0xff]
        %717 = vmatpush.msra.mxu0 %v716
        %718 = vmatpush.msra.mxu0 %v715
        %719 = vmatpush.msra.mxu0 %v714
        %720 = vmatpush.msra.mxu0 %v713
        %721 = vmatpush.msra.mxu0 %v712
        %722 = vmatpush.msra.mxu0 %v711
        %723 = vmatpush.msra.mxu0 %v710
        %724 = vmatpush.msra.mxu0 %v709
        %725 = vmatpush.msra.mxu0 %v708
        %726 = vmatpush.msra.mxu0 %v707
        %727 = vmatpush.msra.mxu0 %v706
        %728 = vmatpush.msra.mxu0 %v705
        %729 = vmatpush.msra.mxu0 %v704
        %730 = vmatpush.msra.mxu0 %v703
        %731 = vmatpush.msra.mxu0 %v702
        %732 = vmatpush.msra.mxu0 %v701
        %733 = vmatmul.f32.gmra.mxu0 %v692
        %v734 = vpop.f32.mrf.mxu0
        %v735 = vadd.f32 0.0, %v734
        %736 = vmatmul.f32.gmra.mxu0 %v693
        %v737 = vpop.f32.mrf.mxu0
        %v738 = vadd.f32 0.0, %v737
        %739 = vmatmul.f32.gmra.mxu0 %v694
        %v740 = vpop.f32.mrf.mxu0
        %v741 = vadd.f32 0.0, %v740
        %742 = vmatmul.f32.gmra.mxu0 %v695
        %v743 = vpop.f32.mrf.mxu0
        %v744 = vadd.f32 0.0, %v743
        %745 = vmatmul.f32.gmra.mxu0 %v696
        %v746 = vpop.f32.mrf.mxu0
        %v747 = vadd.f32 0.0, %v746
        %748 = vmatmul.f32.gmra.mxu0 %v697
        %v749 = vpop.f32.mrf.mxu0
        %v750 = vadd.f32 0.0, %v749
        %751 = vmatmul.f32.gmra.mxu0 %v698
        %v752 = vpop.f32.mrf.mxu0
        %v753 = vadd.f32 0.0, %v752
        %754 = vmatmul.f32.gmra.mxu0 %v699
        %v755 = vpop.f32.mrf.mxu0
        %v756 = vadd.f32 0.0, %v755
        %757 = vdwg.mxu0
        %v758 = vadd.f32 %v683, %v735
        %v759 = vadd.f32 %v684, %v738
        %v760 = vadd.f32 %v685, %v741
        %v761 = vadd.f32 %v686, %v744
        %v762 = vadd.f32 %v687, %v747
        %v763 = vadd.f32 %v688, %v750
        %v764 = vadd.f32 %v689, %v753
        %v765 = vadd.f32 %v690, %v756
        %v766 = vld [vmem:[%s616 + $0x1] sm:$0xff]
        %v767 = vld [vmem:[%s616 + $0x11] sm:$0xff]
        %v768 = vld [vmem:[%s616 + $0x21] sm:$0xff]
        %v769 = vld [vmem:[%s616 + $0x31] sm:$0xff]
        %v770 = vld [vmem:[%s616 + $0x41] sm:$0xff]
        %v771 = vld [vmem:[%s616 + $0x51] sm:$0xff]
        %v772 = vld [vmem:[%s616 + $0x61] sm:$0xff]
        %v773 = vld [vmem:[%s616 + $0x71] sm:$0xff]
        %s774 = scalar_lea.vmem %s1, 1024
        %v775 = vld [vmem:[%s774] sm:$0xff]
        %v776 = vld [vmem:[%s774 + $0x8] sm:$0xff]
        %v777 = vld [vmem:[%s774 + $0x10] sm:$0xff]
        %v778 = vld [vmem:[%s774 + $0x18] sm:$0xff]
        %v779 = vld [vmem:[%s774 + $0x20] sm:$0xff]
        %v780 = vld [vmem:[%s774 + $0x28] sm:$0xff]
        %v781 = vld [vmem:[%s774 + $0x30] sm:$0xff]
        %v782 = vld [vmem:[%s774 + $0x38] sm:$0xff]
        %v783 = vld [vmem:[%s774 + $0x40] sm:$0xff]
        %v784 = vld [vmem:[%s774 + $0x48] sm:$0xff]
        %v785 = vld [vmem:[%s774 + $0x50] sm:$0xff]
        %v786 = vld [vmem:[%s774 + $0x58] sm:$0xff]
        %v787 = vld [vmem:[%s774 + $0x60] sm:$0xff]
        %v788 = vld [vmem:[%s774 + $0x68] sm:$0xff]
        %v789 = vld [vmem:[%s774 + $0x70] sm:$0xff]
        %v790 = vld [vmem:[%s774 + $0x78] sm:$0xff]
        %791 = vmatpush.msra.mxu0 %v790
        %792 = vmatpush.msra.mxu0 %v789
        %793 = vmatpush.msra.mxu0 %v788
        %794 = vmatpush.msra.mxu0 %v787
        %795 = vmatpush.msra.mxu0 %v786
        %796 = vmatpush.msra.mxu0 %v785
        %797 = vmatpush.msra.mxu0 %v784
        %798 = vmatpush.msra.mxu0 %v783
        %799 = vmatpush.msra.mxu0 %v782
        %800 = vmatpush.msra.mxu0 %v781
        %801 = vmatpush.msra.mxu0 %v780
        %802 = vmatpush.msra.mxu0 %v779
        %803 = vmatpush.msra.mxu0 %v778
        %804 = vmatpush.msra.mxu0 %v777
        %805 = vmatpush.msra.mxu0 %v776
        %806 = vmatpush.msra.mxu0 %v775
        %807 = vmatmul.f32.gmra.mxu0 %v766
        %v808 = vpop.f32.mrf.mxu0
        %v809 = vadd.f32 0.0, %v808
        %810 = vmatmul.f32.gmra.mxu0 %v767
        %v811 = vpop.f32.mrf.mxu0
        %v812 = vadd.f32 0.0, %v811
        %813 = vmatmul.f32.gmra.mxu0 %v768
        %v814 = vpop.f32.mrf.mxu0
        %v815 = vadd.f32 0.0, %v814
        %816 = vmatmul.f32.gmra.mxu0 %v769
        %v817 = vpop.f32.mrf.mxu0
        %v818 = vadd.f32 0.0, %v817
        %819 = vmatmul.f32.gmra.mxu0 %v770
        %v820 = vpop.f32.mrf.mxu0
        %v821 = vadd.f32 0.0, %v820
        %822 = vmatmul.f32.gmra.mxu0 %v771
        %v823 = vpop.f32.mrf.mxu0
        %v824 = vadd.f32 0.0, %v823
        %825 = vmatmul.f32.gmra.mxu0 %v772
        %v826 = vpop.f32.mrf.mxu0
        %v827 = vadd.f32 0.0, %v826
        %828 = vmatmul.f32.gmra.mxu0 %v773
        %v829 = vpop.f32.mrf.mxu0
        %v830 = vadd.f32 0.0, %v829
        %831 = vdwg.mxu0
        %v832 = vadd.f32 %v758, %v809
        %v833 = vadd.f32 %v759, %v812
        %v834 = vadd.f32 %v760, %v815
        %v835 = vadd.f32 %v761, %v818
        %v836 = vadd.f32 %v762, %v821
        %v837 = vadd.f32 %v763, %v824
        %v838 = vadd.f32 %v764, %v827
        %v839 = vadd.f32 %v765, %v830
        %840 = vst [vmem:[%s170] sm:$0xff] %v832
        %841 = vst [vmem:[%s170 + $0x8] sm:$0xff] %v833
        %842 = vst [vmem:[%s170 + $0x10] sm:$0xff] %v834
        %843 = vst [vmem:[%s170 + $0x18] sm:$0xff] %v835
        %844 = vst [vmem:[%s170 + $0x20] sm:$0xff] %v836
        %845 = vst [vmem:[%s170 + $0x28] sm:$0xff] %v837
        %846 = vst [vmem:[%s170 + $0x30] sm:$0xff] %v838
        %847 = vst [vmem:[%s170 + $0x38] sm:$0xff] %v839
        %v848 = vadd.f32 %v832, %v833
        %v849 = vadd.f32 %v848, %v834
        %v850 = vadd.f32 %v849, %v835
        %v851 = vadd.f32 %v850, %v836
        %v852 = vadd.f32 %v851, %v837
        %v853 = vadd.f32 %v852, %v838
        %v854 = vadd.f32 %v853, %v839
        %v855 = vrot.slane %v854, 4
        %v856 = vadd.f32 %v854, %v855
        %v857 = vrot.slane %v856, 2
        %v858 = vadd.f32 %v856, %v857
        %v859 = vrot.slane %v858, 1
        %v860 = vadd.f32 %v858, %v859
        %v861 = vmul.f32 %v832, %v832
        %v862 = vmul.f32 %v833, %v833
        %v863 = vmul.f32 %v834, %v834
        %v864 = vmul.f32 %v835, %v835
        %v865 = vmul.f32 %v836, %v836
        %v866 = vmul.f32 %v837, %v837
        %v867 = vmul.f32 %v838, %v838
        %v868 = vmul.f32 %v839, %v839
        %v869 = vadd.f32 %v861, %v862
        %v870 = vadd.f32 %v869, %v863
        %v871 = vadd.f32 %v870, %v864
        %v872 = vadd.f32 %v871, %v865
        %v873 = vadd.f32 %v872, %v866
        %v874 = vadd.f32 %v873, %v867
        %v875 = vadd.f32 %v874, %v868
        %v876 = vrot.slane %v875, 4
        %v877 = vadd.f32 %v875, %v876
        %v878 = vrot.slane %v877, 2
        %v879 = vadd.f32 %v877, %v878
        %v880 = vrot.slane %v879, 1
        %v881 = vadd.f32 %v879, %v880
        %v882 = vlaneseq
        %v883 = vshrl.u32 %v882, 7
        %vm884 = vcmp.eq.s32.totalorder %v883, 0
        %vm885 = vcmp.eq.s32.totalorder %v883, 1
        %v886 = vsel %vm885, %v881, 0.0
        %v887 = vsel %vm884, %v860, %v886
        %888 = vst [vmem:[%s177] sm:$0xff] %v887
        %s889 = sand.u32 %s76, 1
        %s890 = scalar_lea.sflag [#allocation3], %s889
        %s891 = sand.u32 %s76, 1
        %s892 = smul.addr %s891, 64
        %s893 = scalar_lea.vmem [#allocation2], %s892
        %s894 = sand.u32 %s102, 1
        %s895 = scalar_lea.sflag [#allocation5], %s894
        %s896 = sand.u32 %s102, 1
        %s897 = smul.addr %s896, 8
        %s898 = scalar_lea.vmem [#allocation4], %s897
        // Predicated region
        $region29: #{tpu_custom_call.1} parent=27 // pred_check
          %p899 = pneg %p86
        $region30: #{tpu_custom_call.1} parent=27 // pred_check_branch
          %901 = sbr.rel (%p899) target = $region32
        $region31: #{tpu_custom_call.1} parent=27 // pred_region
          %s902 = smul.u32 8, %s21
          %904 = vsyncadd %s890, 0
          %s905 = smul.addr %s902, 8
          %s906 = scalar_lea.hbm %s2, %s905
          %s907 = sshll.u32 %s893, 4
          %s908 = int_to_ptr.vmem [resolvable:$true] %s907
          %s909 = sshll.u32 %s906, 4
          %s910 = int_to_ptr.hbm [resolvable:$true] %s909
          %915 = dma.vmem_to_hbm [thread:$0]  %s908, 1024, %s910, %s890, 128, 128, 8
        $region32: #{tpu_custom_call.1} parent=27 // pred_fallthru
          _
        // Predicated region
        $region33: #{tpu_custom_call.1} parent=27 // pred_check
          %p916 = pneg %p112
        $region34: #{tpu_custom_call.1} parent=27 // pred_check_branch
          %918 = sbr.rel (%p916) target = $region36
        $region35: #{tpu_custom_call.1} parent=27 // pred_region
          %920 = vsyncadd %s895, 0
          %s921 = smul.addr %s21, 8
          %s922 = scalar_lea.hbm %s3, %s921
          %s924 = sshll.u32 %s898, 4
          %s925 = int_to_ptr.vmem [resolvable:$true] %s924
          %s926 = sshll.u32 %s922, 4
          %s927 = int_to_ptr.hbm [resolvable:$true] %s926
          %929 = dma.vmem_to_hbm [thread:$0]  %s925, 128, %s927, %s895
        $region36: #{tpu_custom_call.1} parent=27 // pred_fallthru
          _
      $region28: #{tpu_custom_call.1} parent=5 // pred_fallthru
        _
      %p930 = scmp.le.s32.totalorder 2, %s16
      // Predicated region
      $region37: #{tpu_custom_call.1} parent=5 // pred_check
        %p931 = pneg %p930
      $region38: #{tpu_custom_call.1} parent=5 // pred_check_branch
        %933 = sbr.rel (%p931) target = $region40
      $region39: #{tpu_custom_call.1} parent=5 // pred_region
        %s934 = ssub.s32 %s16, 2
        // Predicated region
        $region41: #{tpu_custom_call.1} parent=39 // pred_check
          %p935 = pneg %p92
        $region42: #{tpu_custom_call.1} parent=39 // pred_check_branch
          %937 = sbr.rel (%p935) target = $region44
        $region43: #{tpu_custom_call.1} parent=39 // pred_region
          %s938 = sand.u32 %s77, 1
          %s939 = scalar_lea.sflag [#allocation3], %s938
          %s940 = sand.u32 %s77, 1
          %s941 = smul.addr %s940, 64
          %s942 = scalar_lea.vmem [#allocation2], %s941
          %944 = dma.done %s939, 1024
        $region44: #{tpu_custom_call.1} parent=39 // pred_fallthru
          _
        // Predicated region
        $region45: #{tpu_custom_call.1} parent=39 // pred_check
          %p945 = pneg %p118
        $region46: #{tpu_custom_call.1} parent=39 // pred_check_branch
          %947 = sbr.rel (%p945) target = $region48
        $region47: #{tpu_custom_call.1} parent=39 // pred_region
          %s948 = sand.u32 %s103, 1
          %s949 = scalar_lea.sflag [#allocation5], %s948
          %s950 = sand.u32 %s103, 1
          %s951 = smul.addr %s950, 8
          %s952 = scalar_lea.vmem [#allocation4], %s951
          %954 = dma.done %s949, 128
        $region48: #{tpu_custom_call.1} parent=39 // pred_fallthru
          _
      $region40: #{tpu_custom_call.1} parent=5 // pred_fallthru
        _
    $region6: #{tpu_custom_call.1} parent=1 // loop_footer
      %s20 = sadd.s32 1, %s16
    $region7: #{tpu_custom_call.1} parent=1 // loop_footer_branch
      %15 = sbr.rel target = $region3
    $region8: #{tpu_custom_call.1} parent=1 // loop_exit
      _
    %955 = vsyncpa [#allocation3], 1
    %s956 = scalar_lea.sflag [#allocation3], 1
    %957 = vsyncpa %s956, 1
    %958 = vsyncpa [#allocation5], 1
    %s959 = scalar_lea.sflag [#allocation5], 1
    %960 = vsyncpa %s959, 1

</llo_original>
